<compile_context>
chip_gen: v6e
topology: v6e:2x2x1
jax: 0.10.0
libtpu: 0.0.40
codegen_flags: <defaults>
</compile_context>

<pallas_src>
import functools

import jax
import jax.numpy as jnp
from jax.experimental import pallas as pl
from jax.experimental.pallas import tpu as pltpu


def _channel_attention_kernel(n, *refs):
    """refs = (x_0 ... x_{n-1}, w, bw, v, bv, o).

    x_i : (Bt, fD)      batch tile of branch-i features
    w   : (N, fD, lD)   per-branch W_i (input-major, i.e. torch W_i.weight.T)
    bw  : (N, 1, lD)    per-branch W_i bias
    v   : (N, lD, N)    V weight split per branch (row-block i of torch V.weight.T)
    bv  : (1, N)        V bias
    o   : (Bt, N)       softmax output tile
    """
    x_refs = refs[:n]
    w_ref, bw_ref, v_ref, bv_ref, o_ref = refs[n:]

    # logits = bv + sum_i tanh(x_i @ W_i + bw_i) @ V_i
    # (identical to concat(tanh(...)) @ V because V splits along its input dim).
    logits = bv_ref[...].astype(jnp.float32)              # (1, N), broadcasts over Bt
    for i in range(n):                                     # statically unrolled
        h = jnp.tanh(
            jnp.dot(x_refs[i][...], w_ref[i], preferred_element_type=jnp.float32)
            + bw_ref[i]
        )                                                  # (Bt, lD) f32
        logits = logits + jnp.dot(h, v_ref[i], preferred_element_type=jnp.float32)

    # Numerically-stable, EXACT softmax (no approx reciprocal).
    m = jnp.max(logits, axis=-1, keepdims=True)
    e = jnp.exp(logits - m)
    o_ref[...] = (e / jnp.sum(e, axis=-1, keepdims=True)).astype(o_ref.dtype)


def channel_attention(features, w_stack, bw_stack, v_weight, v_bias, *, b_tile=None):
    """features: sequence of N arrays (B, fD)   (all branches share fD / lD)
       w_stack : (N, fD, lD)  per-branch W_i, input-major (torch W_i.weight.T)
       bw_stack: (N, lD)      per-branch W_i bias
       v_weight: (N*lD, N)    input-major V weight (torch V.weight.T)
       v_bias  : (N,)         V bias
    """
    features = list(features)
    n = len(features)
    b, fd = features[0].shape
    ld = w_stack.shape[-1]
    assert all(f.shape == (b, fd) for f in features), "all branches must share (B, fD)"
    assert w_stack.shape == (n, fd, ld) and bw_stack.shape == (n, ld)
    assert v_weight.shape == (n * ld, n) and v_bias.shape == (n,)

    x_dtype = features[0].dtype

    # Loop-invariant parameter prep (reshape/cast only — no block_diag).  In a
    # real model, hoist this to module init / let jit constant-fold it.
    w = w_stack.astype(x_dtype)                          # match MXU input dtype of X
    bw = bw_stack.reshape(n, 1, ld).astype(jnp.float32)
    v = v_weight.reshape(n, ld, n).astype(jnp.float32)   # [i] == V rows for branch i
    bv = v_bias.reshape(1, n).astype(jnp.float32)

    def round_up(x, m):
        return ((x + m - 1) // m) * m

    if b_tile is None:
        # Size the batch tile from a VMEM budget: the double-buffered feature
        # tiles dominate (weights are KiB-scale and resident).  8 MiB stays far
        # under the 32 MiB default scoped limit on every generation
        # (v5e/v6e: 128 MiB physical, v7x: 64 MiB) — no vmem_limit_bytes needed.
        vmem_budget = 8 << 20
        bytes_per_row = n * fd * jnp.dtype(x_dtype).itemsize
        cap = min(8192, max(8, (vmem_budget // (2 * bytes_per_row)) // 8 * 8))
        # Prefer >= 2 grid steps once B allows it so the "parallel" batch axis
        # actually shards across both v7x TensorCores.
        b_tile = min(cap, max(8, round_up(pl.cdiv(b, 2), 8)))

    bt = max(8, min(round_up(b, 8), b_tile))
    bt = round_up(bt, 8)                                  # sublane multiple
    padded_b = round_up(b, bt)

    # Pad ragged B to a tile multiple (never fall back to one giant block).
    if padded_b != b:
        features = [jnp.pad(f, ((0, padded_b - b), (0, 0))) for f in features]

    grid = (padded_b // bt,)

    x_spec = pl.BlockSpec((bt, fd), lambda i: (i, 0))
    # NOTE: with large tiles, `pipeline_mode=pl.Buffered(3)` on x_spec is worth
    # a sweep to hide DMA issue latency (especially on v7x).
    in_specs = [x_spec] * n + [
        pl.BlockSpec((n, fd, ld), lambda i: (0, 0, 0)),   # W stack    (VMEM-resident)
        pl.BlockSpec((n, 1, ld), lambda i: (0, 0, 0)),    # W biases   (VMEM-resident)
        pl.BlockSpec((n, ld, n), lambda i: (0, 0, 0)),    # V (split)  (VMEM-resident)
        pl.BlockSpec((1, n), lambda i: (0, 0)),           # V bias     (VMEM-resident)
    ]
    # Output stays (B, N): padding N=3 up to 128 lanes would add ~40x output
    # writeback bytes + a wrapper slice copy — more HBM traffic than the few
    # masked stores it removes on this memory-bound kernel.
    out_spec = pl.BlockSpec((bt, n), lambda i: (i, 0))

    out = pl.pallas_call(
        functools.partial(_channel_attention_kernel, n),
        out_shape=jax.ShapeDtypeStruct((padded_b, n), jnp.float32),
        grid_spec=pltpu.PrefetchScalarGridSpec(
            num_scalar_prefetch=0,
            grid=grid,
            in_specs=in_specs,
            out_specs=out_spec,
        ),
        compiler_params=pltpu.CompilerParams(
            dimension_semantics=("parallel",),            # independent batch tiles
        ),
    )(*features, w, bw, v, bv)

    return out[:b] if padded_b != b else out


if __name__ == "__main__":
    # Module config: input_count=N, feature_dim=fD, latent_dim=lD.
    N, FD, LD, B = 3, 32, 16, 8

    key = jax.random.PRNGKey(0)
    keys = jax.random.split(key, 4 + N)

    # Deterministic parameter init (torch.nn.Linear-style uniform bounds).
    w_bound = 1.0 / (FD ** 0.5)
    w_stack = jax.random.uniform(keys[0], (N, FD, LD), jnp.float32, -w_bound, w_bound)
    bw_stack = jax.random.uniform(keys[1], (N, LD), jnp.float32, -w_bound, w_bound)

    v_bound = 1.0 / ((LD * N) ** 0.5)
    v_weight = jax.random.uniform(keys[2], (LD * N, N), jnp.float32, -v_bound, v_bound)
    v_bias = jax.random.uniform(keys[3], (N,), jnp.float32, -v_bound, v_bound)

    # N input features, each (B, feature_dim).
    features = [jax.random.normal(keys[4 + i], (B, FD), jnp.float32) for i in range(N)]

    out = channel_attention(features, w_stack, bw_stack, v_weight, v_bias)
    out = jax.block_until_ready(out)
    assert out.shape == (B, N)

    # Pure-JAX reference mirroring the PyTorch forward.
    ml = jnp.concatenate(
        [jnp.tanh(features[i] @ w_stack[i] + bw_stack[i]) for i in range(N)], axis=1
    )
    ref = jax.nn.softmax(ml @ v_weight + v_bias, axis=-1)

    # Exact in-kernel softmax -> rows sum to 1 up to f32 rounding.
    assert bool(jnp.allclose(jnp.sum(out, axis=-1), 1.0, atol=1e-4))
    # Tolerance covers MXU f32 pass-precision differences between the Mosaic
    # kernel and XLA's default matmul precision used for the reference; in
    # interpret mode the two paths agree to ~1e-6.
    assert bool(jnp.allclose(out, ref, atol=1e-2, rtol=1e-2)), (
        f"max abs err = {float(jnp.max(jnp.abs(out - ref)))}"
    )

    print("KERNEL_OK")
</pallas_src>

<mosaic_0001>
module attributes {stable_mosaic.version = 11 : i64} {
  func.func @_channel_attention_kernel(%arg0: i32, %arg1: memref<8x32xf32, #tpu.memory_space<vmem>>, %arg2: memref<8x32xf32, #tpu.memory_space<vmem>>, %arg3: memref<8x32xf32, #tpu.memory_space<vmem>>, %arg4: memref<3x32x16xf32, #tpu.memory_space<vmem>>, %arg5: memref<3x1x16xf32, #tpu.memory_space<vmem>>, %arg6: memref<3x16x3xf32, #tpu.memory_space<vmem>>, %arg7: memref<1x3xf32, #tpu.memory_space<vmem>>, %arg8: memref<8x3xf32, #tpu.memory_space<vmem>>) attributes {dimension_semantics = [#tpu.dimension_semantics<parallel>], iteration_bounds = array<i64: 1>, scalar_prefetch = 0 : i64, scratch_operands = 0 : i64, tpu.core_type = #tpu.core_type<tc>, window_params = [{transform_indices = @transform_0, window_bounds = array<i64: 8, 32>}, {transform_indices = @transform_1, window_bounds = array<i64: 8, 32>}, {transform_indices = @transform_2, window_bounds = array<i64: 8, 32>}, {pipeline_mode = #tpu.pipeline_mode<synchronous>, transform_indices = @transform_3, window_bounds = array<i64: 3, 32, 16>}, {pipeline_mode = #tpu.pipeline_mode<synchronous>, transform_indices = @transform_4, window_bounds = array<i64: 3, 1, 16>}, {pipeline_mode = #tpu.pipeline_mode<synchronous>, transform_indices = @transform_5, window_bounds = array<i64: 3, 16, 3>}, {pipeline_mode = #tpu.pipeline_mode<synchronous>, transform_indices = @transform_6, window_bounds = array<i64: 1, 3>}, {transform_indices = @transform_7, window_bounds = array<i64: 8, 3>}]} {
    %c0 = arith.constant 0 : index
    %c0_0 = arith.constant 0 : index
    %0 = vector.load %arg7[%c0, %c0_0] : memref<1x3xf32, #tpu.memory_space<vmem>>, vector<1x3xf32>
    %c0_1 = arith.constant 0 : index
    %c0_2 = arith.constant 0 : index
    %1 = vector.load %arg1[%c0_1, %c0_2] : memref<8x32xf32, #tpu.memory_space<vmem>>, vector<8x32xf32>
    %c0_3 = arith.constant 0 : index
    %c0_4 = arith.constant 0 : index
    %c0_5 = arith.constant 0 : index
    %2 = vector.load %arg4[%c0_3, %c0_4, %c0_5] : memref<3x32x16xf32, #tpu.memory_space<vmem>>, vector<1x32x16xf32>
    %3 = vector.shape_cast %2 : vector<1x32x16xf32> to vector<32x16xf32>
    %cst = arith.constant dense<0.000000e+00> : vector<8x16xf32>
    %4 = tpu.matmul %1, %3, %cst {dimension_numbers = #tpu.dot_dimension_numbers<[1], [0], [0], [1], [0, 0, 1, 1], [], []>} : vector<8x32xf32>, vector<32x16xf32>, vector<8x16xf32> -> vector<8x16xf32>
    %c0_6 = arith.constant 0 : index
    %c0_7 = arith.constant 0 : index
    %c0_8 = arith.constant 0 : index
    %5 = vector.load %arg5[%c0_6, %c0_7, %c0_8] : memref<3x1x16xf32, #tpu.memory_space<vmem>>, vector<1x1x16xf32>
    %6 = vector.shape_cast %5 : vector<1x1x16xf32> to vector<1x16xf32>
    %7 = vector.broadcast %6 : vector<1x16xf32> to vector<8x16xf32>
    %8 = arith.addf %4, %7 : vector<8x16xf32>
    %9 = math.tanh %8 : vector<8x16xf32>
    %c0_9 = arith.constant 0 : index
    %c0_10 = arith.constant 0 : index
    %c0_11 = arith.constant 0 : index
    %10 = vector.load %arg6[%c0_9, %c0_10, %c0_11] : memref<3x16x3xf32, #tpu.memory_space<vmem>>, vector<1x16x3xf32>
    %11 = vector.shape_cast %10 : vector<1x16x3xf32> to vector<16x3xf32>
    %cst_12 = arith.constant dense<0.000000e+00> : vector<8x3xf32>
    %12 = tpu.matmul %9, %11, %cst_12 {dimension_numbers = #tpu.dot_dimension_numbers<[1], [0], [0], [1], [0, 0, 1, 1], [], []>} : vector<8x16xf32>, vector<16x3xf32>, vector<8x3xf32> -> vector<8x3xf32>
    %13 = vector.broadcast %0 : vector<1x3xf32> to vector<8x3xf32>
    %14 = arith.addf %13, %12 : vector<8x3xf32>
    %c0_13 = arith.constant 0 : index
    %c0_14 = arith.constant 0 : index
    %15 = vector.load %arg2[%c0_13, %c0_14] : memref<8x32xf32, #tpu.memory_space<vmem>>, vector<8x32xf32>
    %c1 = arith.constant 1 : index
    %c0_15 = arith.constant 0 : index
    %c0_16 = arith.constant 0 : index
    %16 = vector.load %arg4[%c1, %c0_15, %c0_16] : memref<3x32x16xf32, #tpu.memory_space<vmem>>, vector<1x32x16xf32>
    %17 = vector.shape_cast %16 : vector<1x32x16xf32> to vector<32x16xf32>
    %cst_17 = arith.constant dense<0.000000e+00> : vector<8x16xf32>
    %18 = tpu.matmul %15, %17, %cst_17 {dimension_numbers = #tpu.dot_dimension_numbers<[1], [0], [0], [1], [0, 0, 1, 1], [], []>} : vector<8x32xf32>, vector<32x16xf32>, vector<8x16xf32> -> vector<8x16xf32>
    %c1_18 = arith.constant 1 : index
    %c0_19 = arith.constant 0 : index
    %c0_20 = arith.constant 0 : index
    %19 = vector.load %arg5[%c1_18, %c0_19, %c0_20] : memref<3x1x16xf32, #tpu.memory_space<vmem>>, vector<1x1x16xf32>
    %20 = vector.shape_cast %19 : vector<1x1x16xf32> to vector<1x16xf32>
    %21 = vector.broadcast %20 : vector<1x16xf32> to vector<8x16xf32>
    %22 = arith.addf %18, %21 : vector<8x16xf32>
    %23 = math.tanh %22 : vector<8x16xf32>
    %c1_21 = arith.constant 1 : index
    %c0_22 = arith.constant 0 : index
    %c0_23 = arith.constant 0 : index
    %24 = vector.load %arg6[%c1_21, %c0_22, %c0_23] : memref<3x16x3xf32, #tpu.memory_space<vmem>>, vector<1x16x3xf32>
    %25 = vector.shape_cast %24 : vector<1x16x3xf32> to vector<16x3xf32>
    %cst_24 = arith.constant dense<0.000000e+00> : vector<8x3xf32>
    %26 = tpu.matmul %23, %25, %cst_24 {dimension_numbers = #tpu.dot_dimension_numbers<[1], [0], [0], [1], [0, 0, 1, 1], [], []>} : vector<8x16xf32>, vector<16x3xf32>, vector<8x3xf32> -> vector<8x3xf32>
    %27 = arith.addf %14, %26 : vector<8x3xf32>
    %c0_25 = arith.constant 0 : index
    %c0_26 = arith.constant 0 : index
    %28 = vector.load %arg3[%c0_25, %c0_26] : memref<8x32xf32, #tpu.memory_space<vmem>>, vector<8x32xf32>
    %c2 = arith.constant 2 : index
    %c0_27 = arith.constant 0 : index
    %c0_28 = arith.constant 0 : index
    %29 = vector.load %arg4[%c2, %c0_27, %c0_28] : memref<3x32x16xf32, #tpu.memory_space<vmem>>, vector<1x32x16xf32>
    %30 = vector.shape_cast %29 : vector<1x32x16xf32> to vector<32x16xf32>
    %cst_29 = arith.constant dense<0.000000e+00> : vector<8x16xf32>
    %31 = tpu.matmul %28, %30, %cst_29 {dimension_numbers = #tpu.dot_dimension_numbers<[1], [0], [0], [1], [0, 0, 1, 1], [], []>} : vector<8x32xf32>, vector<32x16xf32>, vector<8x16xf32> -> vector<8x16xf32>
    %c2_30 = arith.constant 2 : index
    %c0_31 = arith.constant 0 : index
    %c0_32 = arith.constant 0 : index
    %32 = vector.load %arg5[%c2_30, %c0_31, %c0_32] : memref<3x1x16xf32, #tpu.memory_space<vmem>>, vector<1x1x16xf32>
    %33 = vector.shape_cast %32 : vector<1x1x16xf32> to vector<1x16xf32>
    %34 = vector.broadcast %33 : vector<1x16xf32> to vector<8x16xf32>
    %35 = arith.addf %31, %34 : vector<8x16xf32>
    %36 = math.tanh %35 : vector<8x16xf32>
    %c2_33 = arith.constant 2 : index
    %c0_34 = arith.constant 0 : index
    %c0_35 = arith.constant 0 : index
    %37 = vector.load %arg6[%c2_33, %c0_34, %c0_35] : memref<3x16x3xf32, #tpu.memory_space<vmem>>, vector<1x16x3xf32>
    %38 = vector.shape_cast %37 : vector<1x16x3xf32> to vector<16x3xf32>
    %cst_36 = arith.constant dense<0.000000e+00> : vector<8x3xf32>
    %39 = tpu.matmul %36, %38, %cst_36 {dimension_numbers = #tpu.dot_dimension_numbers<[1], [0], [0], [1], [0, 0, 1, 1], [], []>} : vector<8x16xf32>, vector<16x3xf32>, vector<8x3xf32> -> vector<8x3xf32>
    %40 = arith.addf %27, %39 : vector<8x3xf32>
    %cst_37 = arith.constant dense<0xFF800000> : vector<8xf32>
    %41 = vector.multi_reduction <maximumf>, %40, %cst_37 [1] : vector<8x3xf32> to vector<8xf32>
    %42 = vector.shape_cast %41 : vector<8xf32> to vector<8x1xf32>
    %43 = vector.broadcast %42 : vector<8x1xf32> to vector<8x3xf32>
    %44 = arith.subf %40, %43 : vector<8x3xf32>
    %45 = math.exp %44 : vector<8x3xf32>
    %cst_38 = arith.constant dense<0.000000e+00> : vector<8xf32>
    %46 = vector.multi_reduction <add>, %45, %cst_38 [1] : vector<8x3xf32> to vector<8xf32>
    %47 = vector.shape_cast %46 : vector<8xf32> to vector<8x1xf32>
    %48 = vector.broadcast %47 : vector<8x1xf32> to vector<8x3xf32>
    %49 = arith.divf %45, %48 : vector<8x3xf32>
    %c0_39 = arith.constant 0 : index
    %c0_40 = arith.constant 0 : index
    %50 = vector.load %arg8[%c0_39, %c0_40] : memref<8x3xf32, #tpu.memory_space<vmem>>, vector<8x3xf32>
    tpu.vector_store %arg8[%c0_39, %c0_40], %49 {strides = array<i32>} : memref<8x3xf32, #tpu.memory_space<vmem>>, vector<8x3xf32>,
    return
  }
  func.func @transform_0(%arg0: i32) -> (i32, i32) {
    %c0_i32 = arith.constant 0 : i32
    %c0_i32_0 = arith.constant 0 : i32
    return %arg0, %c0_i32 : i32, i32
  }
  func.func @transform_1(%arg0: i32) -> (i32, i32) {
    %c0_i32 = arith.constant 0 : i32
    %c0_i32_0 = arith.constant 0 : i32
    return %arg0, %c0_i32 : i32, i32
  }
  func.func @transform_2(%arg0: i32) -> (i32, i32) {
    %c0_i32 = arith.constant 0 : i32
    %c0_i32_0 = arith.constant 0 : i32
    return %arg0, %c0_i32 : i32, i32
  }
  func.func @transform_3(%arg0: i32) -> (i32, i32, i32) {
    %c0_i32 = arith.constant 0 : i32
    %c0_i32_0 = arith.constant 0 : i32
    %c0_i32_1 = arith.constant 0 : i32
    %c0_i32_2 = arith.constant 0 : i32
    return %c0_i32, %c0_i32_0, %c0_i32_1 : i32, i32, i32
  }
  func.func @transform_4(%arg0: i32) -> (i32, i32, i32) {
    %c0_i32 = arith.constant 0 : i32
    %c0_i32_0 = arith.constant 0 : i32
    %c0_i32_1 = arith.constant 0 : i32
    %c0_i32_2 = arith.constant 0 : i32
    return %c0_i32, %c0_i32_0, %c0_i32_1 : i32, i32, i32
  }
  func.func @transform_5(%arg0: i32) -> (i32, i32, i32) {
    %c0_i32 = arith.constant 0 : i32
    %c0_i32_0 = arith.constant 0 : i32
    %c0_i32_1 = arith.constant 0 : i32
    %c0_i32_2 = arith.constant 0 : i32
    return %c0_i32, %c0_i32_0, %c0_i32_1 : i32, i32, i32
  }
  func.func @transform_6(%arg0: i32) -> (i32, i32) {
    %c0_i32 = arith.constant 0 : i32
    %c0_i32_0 = arith.constant 0 : i32
    %c0_i32_1 = arith.constant 0 : i32
    return %c0_i32, %c0_i32_0 : i32, i32
  }
  func.func @transform_7(%arg0: i32) -> (i32, i32) {
    %c0_i32 = arith.constant 0 : i32
    %c0_i32_0 = arith.constant 0 : i32
    return %arg0, %c0_i32 : i32, i32
  }
}

</mosaic_0001>

<llo_original>
// kernel: tpu_custom_call.1
$region0: #{tpu_custom_call.1}
  #allocation0 [shape = 'u32[]', space=smem, size = 0x4, offset = 0x4, fixed_abs, tag = 'smem constant byte address 0x4 - core index']
  #allocation1 [shape = 'u32[144,128]{1,0:T(1,128)}', space=vmem, size = 0x12000, scoped, tag = 'internal scratch']
  %s0 = inlined_call_operand.vmem [shape: f32[8,32], index: 0, kind: input, shape index: {}]
  %s1 = inlined_call_operand.vmem [shape: f32[8,32], index: 1, kind: input, shape index: {}]
  %s2 = inlined_call_operand.vmem [shape: f32[8,32], index: 2, kind: input, shape index: {}]
  %s3 = inlined_call_operand.vmem [shape: f32[3,32,16], index: 3, kind: input, shape index: {}]
  %s4 = inlined_call_operand.vmem [shape: f32[3,1,16], index: 4, kind: input, shape index: {}]
  %s5 = inlined_call_operand.vmem [shape: f32[3,16,3], index: 5, kind: input, shape index: {}]
  %s6 = inlined_call_operand.vmem [shape: f32[1,3], index: 6, kind: input, shape index: {}]
  %s7 = inlined_call_operand.vmem [shape: f32[8,3], index: 7, kind: output, shape index: {}]
  %s8 = sld [smem:[#allocation0]]
  $region38: #{tpu_custom_call.1} parent=0
    _
  %s10 = ssub.s32 1, %s8
  %s11 = scalar_select 0, %s10, %s8
  // Predicated region
  $region2: #{tpu_custom_call.1} parent=0 // pred_check
    _
  $region3: #{tpu_custom_call.1} parent=0 // pred_check_branch
    %13 = sbr.rel (0) target = $region5
  $region4: #{tpu_custom_call.1} parent=0 // pred_region
    _
  $region5: #{tpu_custom_call.1} parent=0 // pred_fallthru
    _
  // Predicated region
  $region6: #{tpu_custom_call.1} parent=0 // pred_check
    _
  $region7: #{tpu_custom_call.1} parent=0 // pred_check_branch
    %15 = sbr.rel (0) target = $region9
  $region8: #{tpu_custom_call.1} parent=0 // pred_region
    _
  $region9: #{tpu_custom_call.1} parent=0 // pred_fallthru
    _
  // Predicated region
  $region10: #{tpu_custom_call.1} parent=0 // pred_check
    _
  $region11: #{tpu_custom_call.1} parent=0 // pred_check_branch
    %17 = sbr.rel (0) target = $region13
  $region12: #{tpu_custom_call.1} parent=0 // pred_region
    _
  $region13: #{tpu_custom_call.1} parent=0 // pred_fallthru
    _
  // Predicated region
  $region14: #{tpu_custom_call.1} parent=0 // pred_check
    _
  $region15: #{tpu_custom_call.1} parent=0 // pred_check_branch
    %19 = sbr.rel (0) target = $region17
  $region16: #{tpu_custom_call.1} parent=0 // pred_region
    _
  $region17: #{tpu_custom_call.1} parent=0 // pred_fallthru
    _
  // Predicated region
  $region18: #{tpu_custom_call.1} parent=0 // pred_check
    _
  $region19: #{tpu_custom_call.1} parent=0 // pred_check_branch
    %21 = sbr.rel (0) target = $region21
  $region20: #{tpu_custom_call.1} parent=0 // pred_region
    _
  $region21: #{tpu_custom_call.1} parent=0 // pred_fallthru
    _
  // Predicated region
  $region22: #{tpu_custom_call.1} parent=0 // pred_check
    _
  $region23: #{tpu_custom_call.1} parent=0 // pred_check_branch
    %23 = sbr.rel (0) target = $region25
  $region24: #{tpu_custom_call.1} parent=0 // pred_region
    _
  $region25: #{tpu_custom_call.1} parent=0 // pred_fallthru
    _
  // Predicated region
  $region26: #{tpu_custom_call.1} parent=0 // pred_check
    _
  $region27: #{tpu_custom_call.1} parent=0 // pred_check_branch
    %25 = sbr.rel (0) target = $region29
  $region28: #{tpu_custom_call.1} parent=0 // pred_region
    _
  $region29: #{tpu_custom_call.1} parent=0 // pred_fallthru
    _
  %v26 = vld [vmem:[%s6] sm:$0x1]
  %v27 = vld [vmem:[%s0] sm:$0xff]
  %v28 = vld [vmem:[%s3] sm:$0xff]
  %v29 = vld [vmem:[%s3 + $0x8] sm:$0xff]
  %v30 = vld [vmem:[%s3 + $0x10] sm:$0xff]
  %v31 = vld [vmem:[%s3 + $0x18] sm:$0xff]
  %v32 = vld [vmem:[%s4] sm:$0x1]
  %v34 = vlaneseq
  %v35 = vshrl.u32 %v34, 7
  %v36 = vsub.s32 0, %v35
  %v37 = vrot.slane %v32, %v36
  %vm39 = vcmask 261120
  %v41 = vsel %vm39, %v27, 0
  %43 = vmatprep.subr.mxu0 0.0
  %44 = vmatpush1.msra.mxu0 0.0
  %45 = vmatprep.subr.mxu0 0.0
  %46 = vmatpush1.msra.mxu0 0.0
  %47 = vmatprep.subr.mxu0 0.0
  %48 = vmatpush1.msra.mxu0 0.0
  %49 = vmatprep.subr.mxu0 0.0
  %50 = vmatpush1.msra.mxu0 0.0
  %51 = vmatprep.subr.mxu0 0.0
  %52 = vmatpush1.msra.mxu0 0.0
  %53 = vmatprep.subr.mxu0 0.0
  %54 = vmatpush1.msra.mxu0 0.0
  %55 = vmatprep.subr.mxu0 0.0
  %56 = vmatpush1.msra.mxu0 0.0
  %57 = vmatprep.subr.mxu0 0.0
  %58 = vmatpush1.msra.mxu0 0.0
  %59 = vmatprep.subr.mxu0 0.0
  %60 = vmatpush1.msra.mxu0 0.0
  %61 = vmatprep.subr.mxu0 0.0
  %62 = vmatpush1.msra.mxu0 0.0
  %63 = vmatprep.subr.mxu0 0.0
  %64 = vmatpush1.msra.mxu0 0.0
  %65 = vmatprep.subr.mxu0 0.0
  %66 = vmatpush1.msra.mxu0 0.0
  %67 = vmatprep.subr.mxu0 0.0
  %68 = vmatpush1.msra.mxu0 %v31
  %69 = vmatprep.subr.mxu0 0.0
  %70 = vmatpush1.msra.mxu0 %v30
  %71 = vmatprep.subr.mxu0 0.0
  %72 = vmatpush1.msra.mxu0 %v29
  %73 = vmatprep.subr.mxu0 0.0
  %74 = vmatpush1.msra.mxu0 %v28
  %75 = vmatprep.subr.mxu0 0.0
  %76 = vmatpush2.msra.mxu0 0.0
  %77 = vmatprep.subr.mxu0 0.0
  %78 = vmatpush2.msra.mxu0 0.0
  %79 = vmatprep.subr.mxu0 0.0
  %80 = vmatpush2.msra.mxu0 0.0
  %81 = vmatprep.subr.mxu0 0.0
  %82 = vmatpush2.msra.mxu0 0.0
  %83 = vmatprep.subr.mxu0 0.0
  %84 = vmatpush2.msra.mxu0 0.0
  %85 = vmatprep.subr.mxu0 0.0
  %86 = vmatpush2.msra.mxu0 0.0
  %87 = vmatprep.subr.mxu0 0.0
  %88 = vmatpush2.msra.mxu0 0.0
  %89 = vmatprep.subr.mxu0 0.0
  %90 = vmatpush2.msra.mxu0 0.0
  %91 = vmatprep.subr.mxu0 0.0
  %92 = vmatpush2.msra.mxu0 0.0
  %93 = vmatprep.subr.mxu0 0.0
  %94 = vmatpush2.msra.mxu0 0.0
  %95 = vmatprep.subr.mxu0 0.0
  %96 = vmatpush2.msra.mxu0 0.0
  %97 = vmatprep.subr.mxu0 0.0
  %98 = vmatpush2.msra.mxu0 0.0
  %99 = vmatprep.subr.mxu0 0.0
  %100 = vmatpush2.msra.mxu0 0.0
  %101 = vmatprep.subr.mxu0 0.0
  %102 = vmatpush2.msra.mxu0 0.0
  %103 = vmatprep.subr.mxu0 0.0
  %104 = vmatpush2.msra.mxu0 0.0
  %105 = vmatprep.subr.mxu0 0.0
  %106 = vmatpush2.msra.mxu0 0.0
  %107 = vmatprep.mubr.f32.mxu0 0.0
  %108 = vmatmul.mubr.f32.gmra.mxu0 %v41
  %v109 = vpop.f32.mrf.mxu0
  %v110 = vadd.f32 %v37, %v109
  %v111 = vpop.f32.mrf.mxu0
  %112 = vdwg.mxu0
  %v113 = vtanh.pop %v110
  %v114 = vld [vmem:[%s5] sm:$0xff]
  %v115 = vld [vmem:[%s5 + $0x8] sm:$0xff]
  %vm116 = vcmask 130048
  %v118 = vsel %vm116, %v113, 0
  %120 = vmatprep.subr.mxu0 0.0
  %121 = vmatpush1.msra.mxu0 0.0
  %122 = vmatprep.subr.mxu0 0.0
  %123 = vmatpush1.msra.mxu0 0.0
  %124 = vmatprep.subr.mxu0 0.0
  %125 = vmatpush1.msra.mxu0 0.0
  %126 = vmatprep.subr.mxu0 0.0
  %127 = vmatpush1.msra.mxu0 0.0
  %128 = vmatprep.subr.mxu0 0.0
  %129 = vmatpush1.msra.mxu0 0.0
  %130 = vmatprep.subr.mxu0 0.0
  %131 = vmatpush1.msra.mxu0 0.0
  %132 = vmatprep.subr.mxu0 0.0
  %133 = vmatpush1.msra.mxu0 0.0
  %134 = vmatprep.subr.mxu0 0.0
  %135 = vmatpush1.msra.mxu0 0.0
  %136 = vmatprep.subr.mxu0 0.0
  %137 = vmatpush1.msra.mxu0 0.0
  %138 = vmatprep.subr.mxu0 0.0
  %139 = vmatpush1.msra.mxu0 0.0
  %140 = vmatprep.subr.mxu0 0.0
  %141 = vmatpush1.msra.mxu0 0.0
  %142 = vmatprep.subr.mxu0 0.0
  %143 = vmatpush1.msra.mxu0 0.0
  %144 = vmatprep.subr.mxu0 0.0
  %145 = vmatpush1.msra.mxu0 0.0
  %146 = vmatprep.subr.mxu0 0.0
  %147 = vmatpush1.msra.mxu0 0.0
  %148 = vmatprep.subr.mxu0 0.0
  %149 = vmatpush1.msra.mxu0 %v115
  %150 = vmatprep.subr.mxu0 0.0
  %151 = vmatpush1.msra.mxu0 %v114
  %152 = vmatprep.subr.mxu0 0.0
  %153 = vmatpush2.msra.mxu0 0.0
  %154 = vmatprep.subr.mxu0 0.0
  %155 = vmatpush2.msra.mxu0 0.0
  %156 = vmatprep.subr.mxu0 0.0
  %157 = vmatpush2.msra.mxu0 0.0
  %158 = vmatprep.subr.mxu0 0.0
  %159 = vmatpush2.msra.mxu0 0.0
  %160 = vmatprep.subr.mxu0 0.0
  %161 = vmatpush2.msra.mxu0 0.0
  %162 = vmatprep.subr.mxu0 0.0
  %163 = vmatpush2.msra.mxu0 0.0
  %164 = vmatprep.subr.mxu0 0.0
  %165 = vmatpush2.msra.mxu0 0.0
  %166 = vmatprep.subr.mxu0 0.0
  %167 = vmatpush2.msra.mxu0 0.0
  %168 = vmatprep.subr.mxu0 0.0
  %169 = vmatpush2.msra.mxu0 0.0
  %170 = vmatprep.subr.mxu0 0.0
  %171 = vmatpush2.msra.mxu0 0.0
  %172 = vmatprep.subr.mxu0 0.0
  %173 = vmatpush2.msra.mxu0 0.0
  %174 = vmatprep.subr.mxu0 0.0
  %175 = vmatpush2.msra.mxu0 0.0
  %176 = vmatprep.subr.mxu0 0.0
  %177 = vmatpush2.msra.mxu0 0.0
  %178 = vmatprep.subr.mxu0 0.0
  %179 = vmatpush2.msra.mxu0 0.0
  %180 = vmatprep.subr.mxu0 0.0
  %181 = vmatpush2.msra.mxu0 0.0
  %182 = vmatprep.subr.mxu0 0.0
  %183 = vmatpush2.msra.mxu0 0.0
  %184 = vmatprep.mubr.f32.mxu0 0.0
  %185 = vmatmul.mubr.f32.gmra.mxu0 %v118
  %v186 = vpop.f32.mrf.mxu0
  %v187 = vadd.f32 0.0, %v186
  %v188 = vpop.f32.mrf.mxu0
  %189 = vdwg.mxu0
  %v191 = vlaneseq
  %v192 = vshrl.u32 %v191, 7
  %v193 = vsub.s32 0, %v192
  %v194 = vrot.slane %v26, %v193
  %v196 = vadd.f32 %v194, %v187
  %v197 = vld [vmem:[%s1] sm:$0xff]
  %s198 = scalar_lea.vmem %s3, 32
  %v199 = vld [vmem:[%s198] sm:$0xff]
  %v200 = vld [vmem:[%s198 + $0x8] sm:$0xff]
  %v201 = vld [vmem:[%s198 + $0x10] sm:$0xff]
  %v202 = vld [vmem:[%s198 + $0x18] sm:$0xff]
  %s203 = scalar_lea.vmem %s4, 1
  %v204 = vld [vmem:[%s203] sm:$0x1]
  %v206 = vlaneseq
  %v207 = vshrl.u32 %v206, 7
  %v208 = vsub.s32 0, %v207
  %v209 = vrot.slane %v204, %v208
  %v212 = vsel %vm39, %v197, 0
  %214 = vmatprep.subr.mxu0 0.0
  %215 = vmatpush1.msra.mxu0 0.0
  %216 = vmatprep.subr.mxu0 0.0
  %217 = vmatpush1.msra.mxu0 0.0
  %218 = vmatprep.subr.mxu0 0.0
  %219 = vmatpush1.msra.mxu0 0.0
  %220 = vmatprep.subr.mxu0 0.0
  %221 = vmatpush1.msra.mxu0 0.0
  %222 = vmatprep.subr.mxu0 0.0
  %223 = vmatpush1.msra.mxu0 0.0
  %224 = vmatprep.subr.mxu0 0.0
  %225 = vmatpush1.msra.mxu0 0.0
  %226 = vmatprep.subr.mxu0 0.0
  %227 = vmatpush1.msra.mxu0 0.0
  %228 = vmatprep.subr.mxu0 0.0
  %229 = vmatpush1.msra.mxu0 0.0
  %230 = vmatprep.subr.mxu0 0.0
  %231 = vmatpush1.msra.mxu0 0.0
  %232 = vmatprep.subr.mxu0 0.0
  %233 = vmatpush1.msra.mxu0 0.0
  %234 = vmatprep.subr.mxu0 0.0
  %235 = vmatpush1.msra.mxu0 0.0
  %236 = vmatprep.subr.mxu0 0.0
  %237 = vmatpush1.msra.mxu0 0.0
  %238 = vmatprep.subr.mxu0 0.0
  %239 = vmatpush1.msra.mxu0 %v202
  %240 = vmatprep.subr.mxu0 0.0
  %241 = vmatpush1.msra.mxu0 %v201
  %242 = vmatprep.subr.mxu0 0.0
  %243 = vmatpush1.msra.mxu0 %v200
  %244 = vmatprep.subr.mxu0 0.0
  %245 = vmatpush1.msra.mxu0 %v199
  %246 = vmatprep.subr.mxu0 0.0
  %247 = vmatpush2.msra.mxu0 0.0
  %248 = vmatprep.subr.mxu0 0.0
  %249 = vmatpush2.msra.mxu0 0.0
  %250 = vmatprep.subr.mxu0 0.0
  %251 = vmatpush2.msra.mxu0 0.0
  %252 = vmatprep.subr.mxu0 0.0
  %253 = vmatpush2.msra.mxu0 0.0
  %254 = vmatprep.subr.mxu0 0.0
  %255 = vmatpush2.msra.mxu0 0.0
  %256 = vmatprep.subr.mxu0 0.0
  %257 = vmatpush2.msra.mxu0 0.0
  %258 = vmatprep.subr.mxu0 0.0
  %259 = vmatpush2.msra.mxu0 0.0
  %260 = vmatprep.subr.mxu0 0.0
  %261 = vmatpush2.msra.mxu0 0.0
  %262 = vmatprep.subr.mxu0 0.0
  %263 = vmatpush2.msra.mxu0 0.0
  %264 = vmatprep.subr.mxu0 0.0
  %265 = vmatpush2.msra.mxu0 0.0
  %266 = vmatprep.subr.mxu0 0.0
  %267 = vmatpush2.msra.mxu0 0.0
  %268 = vmatprep.subr.mxu0 0.0
  %269 = vmatpush2.msra.mxu0 0.0
  %270 = vmatprep.subr.mxu0 0.0
  %271 = vmatpush2.msra.mxu0 0.0
  %272 = vmatprep.subr.mxu0 0.0
  %273 = vmatpush2.msra.mxu0 0.0
  %274 = vmatprep.subr.mxu0 0.0
  %275 = vmatpush2.msra.mxu0 0.0
  %276 = vmatprep.subr.mxu0 0.0
  %277 = vmatpush2.msra.mxu0 0.0
  %278 = vmatprep.mubr.f32.mxu0 0.0
  %279 = vmatmul.mubr.f32.gmra.mxu0 %v212
  %v280 = vpop.f32.mrf.mxu0
  %v281 = vadd.f32 %v209, %v280
  %v282 = vpop.f32.mrf.mxu0
  %283 = vdwg.mxu0
  %v284 = vtanh.pop %v281
  %s285 = scalar_lea.vmem %s5, 16
  %v286 = vld [vmem:[%s285] sm:$0xff]
  %v287 = vld [vmem:[%s285 + $0x8] sm:$0xff]
  %v289 = vsel %vm116, %v284, 0
  %291 = vmatprep.subr.mxu0 0.0
  %292 = vmatpush1.msra.mxu0 0.0
  %293 = vmatprep.subr.mxu0 0.0
  %294 = vmatpush1.msra.mxu0 0.0
  %295 = vmatprep.subr.mxu0 0.0
  %296 = vmatpush1.msra.mxu0 0.0
  %297 = vmatprep.subr.mxu0 0.0
  %298 = vmatpush1.msra.mxu0 0.0
  %299 = vmatprep.subr.mxu0 0.0
  %300 = vmatpush1.msra.mxu0 0.0
  %301 = vmatprep.subr.mxu0 0.0
  %302 = vmatpush1.msra.mxu0 0.0
  %303 = vmatprep.subr.mxu0 0.0
  %304 = vmatpush1.msra.mxu0 0.0
  %305 = vmatprep.subr.mxu0 0.0
  %306 = vmatpush1.msra.mxu0 0.0
  %307 = vmatprep.subr.mxu0 0.0
  %308 = vmatpush1.msra.mxu0 0.0
  %309 = vmatprep.subr.mxu0 0.0
  %310 = vmatpush1.msra.mxu0 0.0
  %311 = vmatprep.subr.mxu0 0.0
  %312 = vmatpush1.msra.mxu0 0.0
  %313 = vmatprep.subr.mxu0 0.0
  %314 = vmatpush1.msra.mxu0 0.0
  %315 = vmatprep.subr.mxu0 0.0
  %316 = vmatpush1.msra.mxu0 0.0
  %317 = vmatprep.subr.mxu0 0.0
  %318 = vmatpush1.msra.mxu0 0.0
  %319 = vmatprep.subr.mxu0 0.0
  %320 = vmatpush1.msra.mxu0 %v287
  %321 = vmatprep.subr.mxu0 0.0
  %322 = vmatpush1.msra.mxu0 %v286
  %323 = vmatprep.subr.mxu0 0.0
  %324 = vmatpush2.msra.mxu0 0.0
  %325 = vmatprep.subr.mxu0 0.0
  %326 = vmatpush2.msra.mxu0 0.0
  %327 = vmatprep.subr.mxu0 0.0
  %328 = vmatpush2.msra.mxu0 0.0
  %329 = vmatprep.subr.mxu0 0.0
  %330 = vmatpush2.msra.mxu0 0.0
  %331 = vmatprep.subr.mxu0 0.0
  %332 = vmatpush2.msra.mxu0 0.0
  %333 = vmatprep.subr.mxu0 0.0
  %334 = vmatpush2.msra.mxu0 0.0
  %335 = vmatprep.subr.mxu0 0.0
  %336 = vmatpush2.msra.mxu0 0.0
  %337 = vmatprep.subr.mxu0 0.0
  %338 = vmatpush2.msra.mxu0 0.0
  %339 = vmatprep.subr.mxu0 0.0
  %340 = vmatpush2.msra.mxu0 0.0
  %341 = vmatprep.subr.mxu0 0.0
  %342 = vmatpush2.msra.mxu0 0.0
  %343 = vmatprep.subr.mxu0 0.0
  %344 = vmatpush2.msra.mxu0 0.0
  %345 = vmatprep.subr.mxu0 0.0
  %346 = vmatpush2.msra.mxu0 0.0
  %347 = vmatprep.subr.mxu0 0.0
  %348 = vmatpush2.msra.mxu0 0.0
  %349 = vmatprep.subr.mxu0 0.0
  %350 = vmatpush2.msra.mxu0 0.0
  %351 = vmatprep.subr.mxu0 0.0
  %352 = vmatpush2.msra.mxu0 0.0
  %353 = vmatprep.subr.mxu0 0.0
  %354 = vmatpush2.msra.mxu0 0.0
  %355 = vmatprep.mubr.f32.mxu0 0.0
  %356 = vmatmul.mubr.f32.gmra.mxu0 %v289
  %v357 = vpop.f32.mrf.mxu0
  %v358 = vadd.f32 0.0, %v357
  %v359 = vpop.f32.mrf.mxu0
  %360 = vdwg.mxu0
  %v361 = vadd.f32 %v196, %v358
  %v362 = vld [vmem:[%s2] sm:$0xff]
  %s363 = scalar_lea.vmem %s3, 64
  %v364 = vld [vmem:[%s363] sm:$0xff]
  %v365 = vld [vmem:[%s363 + $0x8] sm:$0xff]
  %v366 = vld [vmem:[%s363 + $0x10] sm:$0xff]
  %v367 = vld [vmem:[%s363 + $0x18] sm:$0xff]
  %s368 = scalar_lea.vmem %s4, 2
  %v369 = vld [vmem:[%s368] sm:$0x1]
  %v371 = vlaneseq
  %v372 = vshrl.u32 %v371, 7
  %v373 = vsub.s32 0, %v372
  %v374 = vrot.slane %v369, %v373
  %v377 = vsel %vm39, %v362, 0
  %379 = vmatprep.subr.mxu0 0.0
  %380 = vmatpush1.msra.mxu0 0.0
  %381 = vmatprep.subr.mxu0 0.0
  %382 = vmatpush1.msra.mxu0 0.0
  %383 = vmatprep.subr.mxu0 0.0
  %384 = vmatpush1.msra.mxu0 0.0
  %385 = vmatprep.subr.mxu0 0.0
  %386 = vmatpush1.msra.mxu0 0.0
  %387 = vmatprep.subr.mxu0 0.0
  %388 = vmatpush1.msra.mxu0 0.0
  %389 = vmatprep.subr.mxu0 0.0
  %390 = vmatpush1.msra.mxu0 0.0
  %391 = vmatprep.subr.mxu0 0.0
  %392 = vmatpush1.msra.mxu0 0.0
  %393 = vmatprep.subr.mxu0 0.0
  %394 = vmatpush1.msra.mxu0 0.0
  %395 = vmatprep.subr.mxu0 0.0
  %396 = vmatpush1.msra.mxu0 0.0
  %397 = vmatprep.subr.mxu0 0.0
  %398 = vmatpush1.msra.mxu0 0.0
  %399 = vmatprep.subr.mxu0 0.0
  %400 = vmatpush1.msra.mxu0 0.0
  %401 = vmatprep.subr.mxu0 0.0
  %402 = vmatpush1.msra.mxu0 0.0
  %403 = vmatprep.subr.mxu0 0.0
  %404 = vmatpush1.msra.mxu0 %v367
  %405 = vmatprep.subr.mxu0 0.0
  %406 = vmatpush1.msra.mxu0 %v366
  %407 = vmatprep.subr.mxu0 0.0
  %408 = vmatpush1.msra.mxu0 %v365
  %409 = vmatprep.subr.mxu0 0.0
  %410 = vmatpush1.msra.mxu0 %v364
  %411 = vmatprep.subr.mxu0 0.0
  %412 = vmatpush2.msra.mxu0 0.0
  %413 = vmatprep.subr.mxu0 0.0
  %414 = vmatpush2.msra.mxu0 0.0
  %415 = vmatprep.subr.mxu0 0.0
  %416 = vmatpush2.msra.mxu0 0.0
  %417 = vmatprep.subr.mxu0 0.0
  %418 = vmatpush2.msra.mxu0 0.0
  %419 = vmatprep.subr.mxu0 0.0
  %420 = vmatpush2.msra.mxu0 0.0
  %421 = vmatprep.subr.mxu0 0.0
  %422 = vmatpush2.msra.mxu0 0.0
  %423 = vmatprep.subr.mxu0 0.0
  %424 = vmatpush2.msra.mxu0 0.0
  %425 = vmatprep.subr.mxu0 0.0
  %426 = vmatpush2.msra.mxu0 0.0
  %427 = vmatprep.subr.mxu0 0.0
  %428 = vmatpush2.msra.mxu0 0.0
  %429 = vmatprep.subr.mxu0 0.0
  %430 = vmatpush2.msra.mxu0 0.0
  %431 = vmatprep.subr.mxu0 0.0
  %432 = vmatpush2.msra.mxu0 0.0
  %433 = vmatprep.subr.mxu0 0.0
  %434 = vmatpush2.msra.mxu0 0.0
  %435 = vmatprep.subr.mxu0 0.0
  %436 = vmatpush2.msra.mxu0 0.0
  %437 = vmatprep.subr.mxu0 0.0
  %438 = vmatpush2.msra.mxu0 0.0
  %439 = vmatprep.subr.mxu0 0.0
  %440 = vmatpush2.msra.mxu0 0.0
  %441 = vmatprep.subr.mxu0 0.0
  %442 = vmatpush2.msra.mxu0 0.0
  %443 = vmatprep.mubr.f32.mxu0 0.0
  %444 = vmatmul.mubr.f32.gmra.mxu0 %v377
  %v445 = vpop.f32.mrf.mxu0
  %v446 = vadd.f32 %v374, %v445
  %v447 = vpop.f32.mrf.mxu0
  %448 = vdwg.mxu0
  %v449 = vtanh.pop %v446
  %s450 = scalar_lea.vmem %s5, 32
  %v451 = vld [vmem:[%s450] sm:$0xff]
  %v452 = vld [vmem:[%s450 + $0x8] sm:$0xff]
  %v454 = vsel %vm116, %v449, 0
  %456 = vmatprep.subr.mxu0 0.0
  %457 = vmatpush1.msra.mxu0 0.0
  %458 = vmatprep.subr.mxu0 0.0
  %459 = vmatpush1.msra.mxu0 0.0
  %460 = vmatprep.subr.mxu0 0.0
  %461 = vmatpush1.msra.mxu0 0.0
  %462 = vmatprep.subr.mxu0 0.0
  %463 = vmatpush1.msra.mxu0 0.0
  %464 = vmatprep.subr.mxu0 0.0
  %465 = vmatpush1.msra.mxu0 0.0
  %466 = vmatprep.subr.mxu0 0.0
  %467 = vmatpush1.msra.mxu0 0.0
  %468 = vmatprep.subr.mxu0 0.0
  %469 = vmatpush1.msra.mxu0 0.0
  %470 = vmatprep.subr.mxu0 0.0
  %471 = vmatpush1.msra.mxu0 0.0
  %472 = vmatprep.subr.mxu0 0.0
  %473 = vmatpush1.msra.mxu0 0.0
  %474 = vmatprep.subr.mxu0 0.0
  %475 = vmatpush1.msra.mxu0 0.0
  %476 = vmatprep.subr.mxu0 0.0
  %477 = vmatpush1.msra.mxu0 0.0
  %478 = vmatprep.subr.mxu0 0.0
  %479 = vmatpush1.msra.mxu0 0.0
  %480 = vmatprep.subr.mxu0 0.0
  %481 = vmatpush1.msra.mxu0 0.0
  %482 = vmatprep.subr.mxu0 0.0
  %483 = vmatpush1.msra.mxu0 0.0
  %484 = vmatprep.subr.mxu0 0.0
  %485 = vmatpush1.msra.mxu0 %v452
  %486 = vmatprep.subr.mxu0 0.0
  %487 = vmatpush1.msra.mxu0 %v451
  %488 = vmatprep.subr.mxu0 0.0
  %489 = vmatpush2.msra.mxu0 0.0
  %490 = vmatprep.subr.mxu0 0.0
  %491 = vmatpush2.msra.mxu0 0.0
  %492 = vmatprep.subr.mxu0 0.0
  %493 = vmatpush2.msra.mxu0 0.0
  %494 = vmatprep.subr.mxu0 0.0
  %495 = vmatpush2.msra.mxu0 0.0
  %496 = vmatprep.subr.mxu0 0.0
  %497 = vmatpush2.msra.mxu0 0.0
  %498 = vmatprep.subr.mxu0 0.0
  %499 = vmatpush2.msra.mxu0 0.0
  %500 = vmatprep.subr.mxu0 0.0
  %501 = vmatpush2.msra.mxu0 0.0
  %502 = vmatprep.subr.mxu0 0.0
  %503 = vmatpush2.msra.mxu0 0.0
  %504 = vmatprep.subr.mxu0 0.0
  %505 = vmatpush2.msra.mxu0 0.0
  %506 = vmatprep.subr.mxu0 0.0
  %507 = vmatpush2.msra.mxu0 0.0
  %508 = vmatprep.subr.mxu0 0.0
  %509 = vmatpush2.msra.mxu0 0.0
  %510 = vmatprep.subr.mxu0 0.0
  %511 = vmatpush2.msra.mxu0 0.0
  %512 = vmatprep.subr.mxu0 0.0
  %513 = vmatpush2.msra.mxu0 0.0
  %514 = vmatprep.subr.mxu0 0.0
  %515 = vmatpush2.msra.mxu0 0.0
  %516 = vmatprep.subr.mxu0 0.0
  %517 = vmatpush2.msra.mxu0 0.0
  %518 = vmatprep.subr.mxu0 0.0
  %519 = vmatpush2.msra.mxu0 0.0
  %520 = vmatprep.mubr.f32.mxu0 0.0
  %521 = vmatmul.mubr.f32.gmra.mxu0 %v454
  %v522 = vpop.f32.mrf.mxu0
  %v523 = vadd.f32 0.0, %v522
  %v524 = vpop.f32.mrf.mxu0
  %525 = vdwg.mxu0
  %v526 = vadd.f32 %v361, %v523
  %vm527 = vcmask 23552
  %v528 = vsel %vm527, %v526, -inf
  %529 = vmax.xlane.f32.xlu0 %v528
  %v530 = vpop.xlane.xlu0 %529
  %v531 = vsub.f32 %v526, %v530
  %v532 = vmul.f32 %v531, 1.442695
  %v533 = vpow.pop %v532
  %v534 = vsel %vm527, %v533, 0.0
  %535 = vadd.xlane.f32.xlu0 %v534
  %v536 = vpop.xlane.xlu0 %535
  %v537 = vrcp.pop %v536
  %v538 = vmul.f32 %v533, %v537
  %539 = vst.msk [vmem:[%s7] sm:$0xff] %vm527, %v538
  // Predicated region
  $region30: #{tpu_custom_call.1} parent=0 // pred_check
    _
  $region31: #{tpu_custom_call.1} parent=0 // pred_check_branch
    %541 = sbr.rel (0) target = $region33
  $region32: #{tpu_custom_call.1} parent=0 // pred_region
    _
  $region33: #{tpu_custom_call.1} parent=0 // pred_fallthru
    _
  // Predicated region
  $region34: #{tpu_custom_call.1} parent=0 // pred_check
    _
  $region35: #{tpu_custom_call.1} parent=0 // pred_check_branch
    %543 = sbr.rel (0) target = $region37
  $region36: #{tpu_custom_call.1} parent=0 // pred_region
    _
  $region37: #{tpu_custom_call.1} parent=0 // pred_fallthru
    _

</llo_original>
